<compile_context>
chip_gen: v7x
topology: tpu7x:2x2x1
jax: 0.10.0
libtpu: 0.0.40
codegen_flags: <defaults>
</compile_context>

<pallas_src>
import math
import numpy as np
import jax
import jax.numpy as jnp
from jax.experimental import pallas as pl
from jax.experimental.pallas import tpu as pltpu

VMEM_LIMIT = 48 * 1024 * 1024  # safe on v5e/v6e (128 MiB) and v7x (64 MiB)


def _gelu(x):
    # TODO(synk): torch.nn.functional.gelu is erf-based; Mosaic has no erf
    # lowering, so the tanh approximation is used (max abs diff ~1e-3).
    return jax.nn.gelu(x, approximate=True)


def _pick_batch_block(B, cap=8):
    """Largest divisor of B that is <= cap (so the grid has no partial blocks)."""
    for c in range(min(B, cap), 0, -1):
        if B % c == 0:
            return c
    return 1


# ---------------------------------------------------------------------------
# In-kernel helpers (operate on loaded VMEM values, all shapes static)
# ---------------------------------------------------------------------------
def _shift_time(x, s):
    """x: (Bb, T, C) -> y with y[:, t] = x[:, t + s], zero-filled out of range."""
    Bb, T, C = x.shape
    if s == 0:
        return x
    z = jnp.zeros((Bb, abs(s), C), x.dtype)
    if s > 0:
        return jnp.concatenate([x[:, s:, :], z], axis=1)
    return jnp.concatenate([z, x[:, :T + s, :]], axis=1)


def _conv1d_im2col(x, w_flat, *, taps, dilation, pad_left):
    """Conv1d as ONE matmul: out[:, t] = sum_k x[:, t + k*dilation - pad_left] @ w[k].
    x: (Bb, T, Cin); w_flat: (taps*Cin, Cout), tap-major row order."""
    Bb, T, Cin = x.shape
    cols = [_shift_time(x, k * dilation - pad_left) for k in range(taps)]
    im2col = jnp.concatenate(cols, axis=-1) if taps > 1 else cols[0]   # (Bb, T, taps*Cin)
    y = jnp.dot(im2col.reshape(Bb * T, taps * Cin), w_flat,
                preferred_element_type=jnp.float32)
    return y.reshape(Bb, T, w_flat.shape[1])


# ---------------------------------------------------------------------------
# Kernel 1: NaN-row masking + input_fc (mask='all_true' => mask == nan_mask)
# ---------------------------------------------------------------------------
def input_fc_pallas(x, w, b, *, bblk):
    B, T, Ci = x.shape
    H = w.shape[1]
    b2 = b.reshape(1, H)

    def kernel(x_ref, w_ref, b_ref, o_ref):
        xv = x_ref[...]                                               # (bblk, T, Ci)
        nan_cnt = jnp.sum(jnp.where(jnp.isnan(xv), 1.0, 0.0),
                          axis=-1, keepdims=True)                     # (bblk, T, 1)
        valid = nan_cnt == 0.0
        xz = jnp.where(valid, xv, 0.0)
        h = jnp.dot(xz.reshape(bblk * T, Ci), w_ref[...],
                    preferred_element_type=jnp.float32) + b_ref[...]
        h = h.reshape(bblk, T, H)
        o_ref[...] = jnp.where(valid, h, 0.0).astype(o_ref.dtype)

    return pl.pallas_call(
        kernel,
        out_shape=jax.ShapeDtypeStruct((B, T, H), x.dtype),
        grid=(B // bblk,),
        in_specs=[
            pl.BlockSpec((bblk, T, Ci), lambda i: (i, 0, 0)),
            pl.BlockSpec((Ci, H), lambda i: (0, 0)),
            pl.BlockSpec((1, H), lambda i: (0, 0)),
        ],
        out_specs=pl.BlockSpec((bblk, T, H), lambda i: (i, 0, 0)),
        compiler_params=pltpu.CompilerParams(
            dimension_semantics=("parallel",),
            vmem_limit_bytes=VMEM_LIMIT),
    )(x, w, b2)


# ---------------------------------------------------------------------------
# Kernel 2: one fused ConvBlock (projector + conv1 + conv2 + residual)
# ---------------------------------------------------------------------------
def conv_block_pallas(h, w1f, b1, w2f, b2, proj_w, proj_b, *, dilation, bblk):
    B, T, Cin = h.shape
    Cout = w1f.shape[1]
    has_proj = proj_w is not None
    b1r = b1.reshape(1, Cout)
    b2r = b2.reshape(1, Cout)

    def kernel(*refs):
        if has_proj:
            h_ref, w1_ref, b1_ref, w2_ref, b2_ref, pw_ref, pb_ref, o_ref = refs
        else:
            h_ref, w1_ref, b1_ref, w2_ref, b2_ref, o_ref = refs
        hv = h_ref[...]                                               # (bblk, T, Cin)
        if has_proj:
            res = jnp.dot(hv.reshape(bblk * T, Cin), pw_ref[...],
                          preferred_element_type=jnp.float32) + pb_ref[...]
            res = res.reshape(bblk, T, Cout)
        else:
            res = hv
        u = _conv1d_im2col(_gelu(hv), w1_ref[...], taps=3,
                           dilation=dilation, pad_left=dilation) + b1_ref[...]
        v = _conv1d_im2col(_gelu(u), w2_ref[...], taps=3,
                           dilation=dilation, pad_left=dilation) + b2_ref[...]
        o_ref[...] = (v + res).astype(o_ref.dtype)

    in_specs = [
        pl.BlockSpec((bblk, T, Cin), lambda i: (i, 0, 0)),
        pl.BlockSpec(w1f.shape, lambda i: (0, 0)),
        pl.BlockSpec((1, Cout), lambda i: (0, 0)),
        pl.BlockSpec(w2f.shape, lambda i: (0, 0)),
        pl.BlockSpec((1, Cout), lambda i: (0, 0)),
    ]
    args = [h, w1f, b1r, w2f, b2r]
    if has_proj:
        in_specs += [pl.BlockSpec(proj_w.shape, lambda i: (0, 0)),
                     pl.BlockSpec((1, Cout), lambda i: (0, 0))]
        args += [proj_w, proj_b.reshape(1, Cout)]

    return pl.pallas_call(
        kernel,
        out_shape=jax.ShapeDtypeStruct((B, T, Cout), h.dtype),
        grid=(B // bblk,),
        in_specs=in_specs,
        out_specs=pl.BlockSpec((bblk, T, Cout), lambda i: (i, 0, 0)),
        compiler_params=pltpu.CompilerParams(
            dimension_semantics=("parallel",),
            vmem_limit_bytes=VMEM_LIMIT),
    )(*args)


# ---------------------------------------------------------------------------
# Kernel 3: fused tail = (local multiscale convs + mean) ++ BandedFourier, one store
# ---------------------------------------------------------------------------
def tail_pallas(h, wl_flat, Fre, Fim, wr, wi, Dre, Dim, tail_bias, *, maxk, bblk):
    B, T, Co = h.shape
    half = wl_flat.shape[1]
    Cout = 2 * half

    def kernel(h_ref, wl_ref, fre_ref, fim_ref, wr_ref, wi_ref,
               dre_ref, dim_ref, tb_ref, o_ref):
        hv = h_ref[...]                                               # (bblk, T, Co)

        # local multiscale: the k in {kernels} causal convs and their mean are
        # pre-folded (host side) into one causal conv with maxk taps (no bias here;
        # biases live in tail_bias).
        loc = _conv1d_im2col(hv, wl_ref[...], taps=maxk,
                             dilation=1, pad_left=maxk - 1)           # (bblk, T, half)

        # global multiscale: rfft -> per-frequency complex matmul -> irfft,
        # all expressed as MXU matmuls (band-restricted DFT matrices).
        fre = fre_ref[...]                                            # (Fb, T)
        fim = fim_ref[...]
        xr_l, xi_l = [], []
        for b in range(bblk):
            xb = hv[b]                                                # (T, Co)
            xr_l.append(jnp.dot(fre, xb, preferred_element_type=jnp.float32))
            xi_l.append(jnp.dot(fim, xb, preferred_element_type=jnp.float32))
        Xr = jnp.stack(xr_l, axis=1)                                  # (Fb, bblk, Co)
        Xi = jnp.stack(xi_l, axis=1)
        wrv = wr_ref[...]                                             # (Fb, Co, half)
        wiv = wi_ref[...]
        # per-frequency complex matmul as an Fb-batched matmul (stays on the MXU)
        Yr = (jnp.einsum('fbi,fio->fbo', Xr, wrv, preferred_element_type=jnp.float32)
              - jnp.einsum('fbi,fio->fbo', Xi, wiv, preferred_element_type=jnp.float32))
        Yi = (jnp.einsum('fbi,fio->fbo', Xr, wiv, preferred_element_type=jnp.float32)
              + jnp.einsum('fbi,fio->fbo', Xi, wrv, preferred_element_type=jnp.float32))
        dre = dre_ref[...]                                            # (T, Fb)
        dim = dim_ref[...]
        g_l = []
        for b in range(bblk):
            g_l.append(jnp.dot(dre, Yr[:, b, :], preferred_element_type=jnp.float32)
                       + jnp.dot(dim, Yi[:, b, :], preferred_element_type=jnp.float32))
        glob = jnp.stack(g_l, axis=0)                                 # (bblk, T, half)

        out = jnp.concatenate([loc, glob], axis=-1) + tb_ref[...]     # (bblk, T, 2*half)
        o_ref[...] = out.astype(o_ref.dtype)

    return pl.pallas_call(
        kernel,
        out_shape=jax.ShapeDtypeStruct((B, T, Cout), h.dtype),
        grid=(B // bblk,),
        in_specs=[
            pl.BlockSpec((bblk, T, Co), lambda i: (i, 0, 0)),
            pl.BlockSpec(wl_flat.shape, lambda i: (0, 0)),
            pl.BlockSpec(Fre.shape, lambda i: (0, 0)),
            pl.BlockSpec(Fim.shape, lambda i: (0, 0)),
            pl.BlockSpec(wr.shape, lambda i: (0, 0, 0)),
            pl.BlockSpec(wi.shape, lambda i: (0, 0, 0)),
            pl.BlockSpec(Dre.shape, lambda i: (0, 0)),
            pl.BlockSpec(Dim.shape, lambda i: (0, 0)),
            pl.BlockSpec(tail_bias.shape, lambda i: (0, 0)),
        ],
        out_specs=pl.BlockSpec((bblk, T, Cout), lambda i: (i, 0, 0)),
        compiler_params=pltpu.CompilerParams(
            dimension_semantics=("parallel",),
            vmem_limit_bytes=VMEM_LIMIT),
    )(h, wl_flat, Fre, Fim, wr, wi, Dre, Dim, tail_bias)


# ---------------------------------------------------------------------------
# Host-side glue: DFT matrices, parameter init (with weight folding), forward
# ---------------------------------------------------------------------------
def make_dft_matrices(T, band, num_bands):
    """Real rfft / irfft matrices restricted to the band's frequency range."""
    total_freqs = T // 2 + 1
    num_freqs = total_freqs // num_bands + (
        total_freqs % num_bands if band == num_bands - 1 else 0)
    start = band * (total_freqs // num_bands)
    freqs = np.arange(start, start + num_freqs)
    t = np.arange(T)
    ang_f = 2.0 * np.pi * np.outer(freqs, t) / T                      # (Fb, T)
    Fre = np.cos(ang_f)
    Fim = -np.sin(ang_f)
    wgt = np.full(num_freqs, 2.0)
    wgt[freqs == 0] = 1.0
    if T % 2 == 0:
        wgt[freqs == T // 2] = 1.0
    ang_t = 2.0 * np.pi * np.outer(t, freqs) / T                      # (T, Fb)
    Dre = wgt[None, :] * np.cos(ang_t) / T
    Dim = -wgt[None, :] * np.sin(ang_t) / T
    return (jnp.asarray(Fre, jnp.float32), jnp.asarray(Fim, jnp.float32),
            jnp.asarray(Dre, jnp.float32), jnp.asarray(Dim, jnp.float32),
            num_freqs)


def init_params(key, input_dims, hidden_dims, output_dims, depth, kernels,
                num_freqs, length, Dre, Dim):
    def nrm(k, shape, fan_in):
        return (1.0 / math.sqrt(fan_in)) * jax.random.normal(k, shape, jnp.float32)

    keys = iter(jax.random.split(key, 256))
    p = {}
    p['fc_w'] = nrm(next(keys), (input_dims, hidden_dims), input_dims)
    p['fc_b'] = nrm(next(keys), (hidden_dims,), input_dims)

    # DilatedConvEncoder: channels = [hidden]*depth + [output], kernel_size=3,
    # dilation 2**i, ConvBlock = conv2(gelu(conv1(gelu(x)))) + residual/projector.
    # TODO(synk): FSNet's gamma-controlled fast-weight adapters are not in the
    # provided source; the standard TS2Vec dilated conv stack is implemented.
    channels = [hidden_dims] * depth + [output_dims]
    blocks = []
    in_ch = hidden_dims
    for i, out_ch in enumerate(channels):
        final = (i == len(channels) - 1)
        w1 = nrm(next(keys), (3, in_ch, out_ch), 3 * in_ch)
        w2 = nrm(next(keys), (3, out_ch, out_ch), 3 * out_ch)
        blk = {'dilation': 2 ** i,
               'conv1_wf': w1.reshape(3 * in_ch, out_ch),      # im2col-flat weight
               'conv1_b': nrm(next(keys), (out_ch,), 3 * in_ch),
               'conv2_wf': w2.reshape(3 * out_ch, out_ch),
               'conv2_b': nrm(next(keys), (out_ch,), 3 * out_ch)}
        if in_ch != out_ch or final:
            blk['proj_w'] = nrm(next(keys), (in_ch, out_ch), in_ch)
            blk['proj_b'] = nrm(next(keys), (out_ch,), in_ch)
        else:
            blk['proj_w'] = None
            blk['proj_b'] = None
        blocks.append(blk)
        in_ch = out_ch
    p['blocks'] = blocks

    # Local multiscale Conv1d(Co, Co//2, k, padding=k-1)[..., :-(k-1)] for each k,
    # then mean over kernels: fold (linearity) into ONE causal conv with maxk taps.
    Co = output_dims
    half = output_dims // 2
    maxk = max(kernels)
    w_comb = jnp.zeros((maxk, Co, half), jnp.float32)
    b_comb = jnp.zeros((half,), jnp.float32)
    for k in kernels:
        wk = nrm(next(keys), (k, Co, half), k * Co)
        bk = nrm(next(keys), (half,), k * Co)
        w_comb = w_comb.at[maxk - k:].add(wk)   # right-align taps (causal lags match)
        b_comb = b_comb + bk
    n_k = float(len(kernels))
    w_comb = w_comb / n_k
    b_comb = b_comb / n_k
    p['local_wf'] = w_comb.reshape(maxk * Co, half)
    p['local_maxk'] = maxk

    # BandedFourierLayer band 0 (freq_mixing=False); complex weight split re/im.
    p['four_wr'] = nrm(next(keys), (num_freqs, Co, half), Co)
    p['four_wi'] = nrm(next(keys), (num_freqs, Co, half), Co)
    br = nrm(next(keys), (num_freqs, half), Co)
    bi = nrm(next(keys), (num_freqs, half), Co)
    # Fold the local-conv bias (constant over t) and the Fourier bias's irfft
    # (a fixed (T, half) waveform) into one time-domain bias added after the
    # fused local/global concat -> a single lane-dense store in the tail kernel.
    four_bias_t = jnp.dot(Dre, br) + jnp.dot(Dim, bi)                 # (T, half)
    loc_bias_t = jnp.broadcast_to(b_comb[None, :], (length, half))    # (T, half)
    p['tail_bias'] = jnp.concatenate([loc_bias_t, four_bias_t], axis=-1)
    return p


def forward(params, x, fourier_mats):
    B = x.shape[0]
    bblk = _pick_batch_block(B)

    # NaN masking + input_fc (mask='all_true' -> mask == nan_mask)
    h = input_fc_pallas(x, params['fc_w'], params['fc_b'], bblk=bblk)

    # feature_extractor: each dilated ConvBlock is one fused pallas_call
    for blk in params['blocks']:
        h = conv_block_pallas(h, blk['conv1_wf'], blk['conv1_b'],
                              blk['conv2_wf'], blk['conv2_b'],
                              blk['proj_w'], blk['proj_b'],
                              dilation=blk['dilation'], bblk=bblk)

    # fused tail: local multiscale (+mean) and global Fourier, concatenated in-kernel
    Fre, Fim, Dre, Dim = fourier_mats
    return tail_pallas(h, params['local_wf'], Fre, Fim,
                       params['four_wr'], params['four_wi'],
                       Dre, Dim, params['tail_bias'],
                       maxk=params['local_maxk'], bblk=bblk)


if __name__ == "__main__":
    B, T = 2, 16
    input_dims, hidden_dims, output_dims = 4, 8, 8
    depth = 2
    kernels = [1, 2, 4]
    num_bands = 1            # BandedFourierLayer length == T == 16

    key = jax.random.PRNGKey(0)
    kx, kp = jax.random.split(key)
    x = jax.random.normal(kx, (B, T, input_dims), jnp.float32)
    x = x.at[0, 3, 1].set(jnp.nan)   # exercise the NaN-row masking path

    Fre, Fim, Dre, Dim, num_freqs = make_dft_matrices(T, band=0, num_bands=num_bands)
    params = init_params(kp, input_dims, hidden_dims, output_dims, depth,
                         kernels, num_freqs, T, Dre, Dim)

    out = forward(params, x, (Fre, Fim, Dre, Dim))
    out = jax.block_until_ready(out)
    assert out.shape == (B, T, output_dims), out.shape
    assert not bool(jnp.any(jnp.isnan(out)))
    print("KERNEL_OK")
</pallas_src>

<mosaic_0001>
module attributes {stable_mosaic.version = 11 : i64} {
  func.func @kernel(%arg0: i32, %arg1: memref<2x16x4xf32, #tpu.memory_space<vmem>>, %arg2: memref<4x8xf32, #tpu.memory_space<vmem>>, %arg3: memref<1x8xf32, #tpu.memory_space<vmem>>, %arg4: memref<2x16x8xf32, #tpu.memory_space<vmem>>) attributes {dimension_semantics = [#tpu.dimension_semantics<parallel>], iteration_bounds = array<i64: 1>, scalar_prefetch = 0 : i64, scratch_operands = 0 : i64, tpu.core_type = #tpu.core_type<tc>, window_params = [{transform_indices = @transform_0, window_bounds = array<i64: 2, 16, 4>}, {pipeline_mode = #tpu.pipeline_mode<synchronous>, transform_indices = @transform_1, window_bounds = array<i64: 4, 8>}, {pipeline_mode = #tpu.pipeline_mode<synchronous>, transform_indices = @transform_2, window_bounds = array<i64: 1, 8>}, {transform_indices = @transform_3, window_bounds = array<i64: 2, 16, 8>}]} {
    %c0 = arith.constant 0 : index
    %c0_0 = arith.constant 0 : index
    %c0_1 = arith.constant 0 : index
    %0 = vector.load %arg1[%c0, %c0_0, %c0_1] : memref<2x16x4xf32, #tpu.memory_space<vmem>>, vector<2x16x4xf32>
    %1 = arith.cmpf one, %0, %0 : vector<2x16x4xf32>
    %cst = arith.constant 1.000000e+00 : f32
    %cst_2 = arith.constant 0.000000e+00 : f32
    %2 = vector.broadcast %cst : f32 to vector<2x16x4xf32>
    %3 = vector.broadcast %cst_2 : f32 to vector<2x16x4xf32>
    %4 = arith.select %1, %2, %3 : vector<2x16x4xi1>, vector<2x16x4xf32>
    %cst_3 = arith.constant dense<0.000000e+00> : vector<2x16xf32>
    %5 = vector.multi_reduction <add>, %4, %cst_3 [2] : vector<2x16x4xf32> to vector<2x16xf32>
    %6 = vector.shape_cast %5 : vector<2x16xf32> to vector<2x16x1xf32>
    %cst_4 = arith.constant 0.000000e+00 : f32
    %7 = vector.broadcast %cst_4 : f32 to vector<2x16x1xf32>
    %8 = arith.cmpf oeq, %6, %7 : vector<2x16x1xf32>
    %cst_5 = arith.constant 0.000000e+00 : f32
    %9 = vector.shape_cast %8 : vector<2x16x1xi1> to vector<2x16x1xi1>
    %10 = vector.broadcast %9 : vector<2x16x1xi1> to vector<2x16x4xi1>
    %11 = vector.broadcast %cst_5 : f32 to vector<2x16x4xf32>
    %12 = arith.select %10, %0, %11 : vector<2x16x4xi1>, vector<2x16x4xf32>
    %13 = vector.shape_cast %12 : vector<2x16x4xf32> to vector<32x4xf32>
    %c0_6 = arith.constant 0 : index
    %c0_7 = arith.constant 0 : index
    %14 = vector.load %arg2[%c0_6, %c0_7] : memref<4x8xf32, #tpu.memory_space<vmem>>, vector<4x8xf32>
    %cst_8 = arith.constant dense<0.000000e+00> : vector<32x8xf32>
    %15 = tpu.matmul %13, %14, %cst_8 {dimension_numbers = #tpu.dot_dimension_numbers<[1], [0], [0], [1], [0, 0, 1, 1], [], []>} : vector<32x4xf32>, vector<4x8xf32>, vector<32x8xf32> -> vector<32x8xf32>
    %c0_9 = arith.constant 0 : index
    %c0_10 = arith.constant 0 : index
    %16 = vector.load %arg3[%c0_9, %c0_10] : memref<1x8xf32, #tpu.memory_space<vmem>>, vector<1x8xf32>
    %17 = vector.broadcast %16 : vector<1x8xf32> to vector<32x8xf32>
    %18 = arith.addf %15, %17 : vector<32x8xf32>
    %19 = vector.shape_cast %18 : vector<32x8xf32> to vector<2x16x8xf32>
    %cst_11 = arith.constant 0.000000e+00 : f32
    %20 = vector.shape_cast %8 : vector<2x16x1xi1> to vector<2x16x1xi1>
    %21 = vector.broadcast %20 : vector<2x16x1xi1> to vector<2x16x8xi1>
    %22 = vector.broadcast %cst_11 : f32 to vector<2x16x8xf32>
    %23 = arith.select %21, %19, %22 : vector<2x16x8xi1>, vector<2x16x8xf32>
    %c0_12 = arith.constant 0 : index
    %c0_13 = arith.constant 0 : index
    %c0_14 = arith.constant 0 : index
    %24 = vector.load %arg4[%c0_12, %c0_13, %c0_14] : memref<2x16x8xf32, #tpu.memory_space<vmem>>, vector<2x16x8xf32>
    tpu.vector_store %arg4[%c0_12, %c0_13, %c0_14], %23 {strides = array<i32>} : memref<2x16x8xf32, #tpu.memory_space<vmem>>, vector<2x16x8xf32>,
    return
  }
  func.func @transform_0(%arg0: i32) -> (i32, i32, i32) {
    %c0_i32 = arith.constant 0 : i32
    %c0_i32_0 = arith.constant 0 : i32
    %c0_i32_1 = arith.constant 0 : i32
    return %arg0, %c0_i32, %c0_i32_0 : i32, i32, i32
  }
  func.func @transform_1(%arg0: i32) -> (i32, i32) {
    %c0_i32 = arith.constant 0 : i32
    %c0_i32_0 = arith.constant 0 : i32
    %c0_i32_1 = arith.constant 0 : i32
    return %c0_i32, %c0_i32_0 : i32, i32
  }
  func.func @transform_2(%arg0: i32) -> (i32, i32) {
    %c0_i32 = arith.constant 0 : i32
    %c0_i32_0 = arith.constant 0 : i32
    %c0_i32_1 = arith.constant 0 : i32
    return %c0_i32, %c0_i32_0 : i32, i32
  }
  func.func @transform_3(%arg0: i32) -> (i32, i32, i32) {
    %c0_i32 = arith.constant 0 : i32
    %c0_i32_0 = arith.constant 0 : i32
    %c0_i32_1 = arith.constant 0 : i32
    return %arg0, %c0_i32, %c0_i32_0 : i32, i32, i32
  }
}

</mosaic_0001>

<llo_original>
// kernel: tpu_custom_call.1
$region0: #{tpu_custom_call.1}
  #allocation0 [shape = 'u32[]', space=smem, size = 0x4, offset = 0x4, fixed_abs, tag = 'smem constant byte address 0x4 - core index']
  #allocation1 [shape = 'u32[144,128]{1,0:T(1,128)}', space=vmem, size = 0x12000, scoped, tag = 'internal scratch']
  %s0 = inlined_call_operand.vmem [shape: f32[2,16,4], index: 0, kind: input, shape index: {}]
  %s1 = inlined_call_operand.vmem [shape: f32[4,8], index: 1, kind: input, shape index: {}]
  %s2 = inlined_call_operand.vmem [shape: f32[1,8], index: 2, kind: input, shape index: {}]
  %s3 = inlined_call_operand.vmem [shape: f32[2,16,8], index: 3, kind: output, shape index: {}]
  %s4 = sld [smem:[#allocation0]]
  $region22: #{tpu_custom_call.1} parent=0
    _
  %s6 = ssub.s32 1, %s4
  %s7 = scalar_select 0, %s6, %s4
  // Predicated region
  $region2: #{tpu_custom_call.1} parent=0 // pred_check
    _
  $region3: #{tpu_custom_call.1} parent=0 // pred_check_branch
    %9 = sbr.rel (0) target = $region5
  $region4: #{tpu_custom_call.1} parent=0 // pred_region
    _
  $region5: #{tpu_custom_call.1} parent=0 // pred_fallthru
    _
  // Predicated region
  $region6: #{tpu_custom_call.1} parent=0 // pred_check
    _
  $region7: #{tpu_custom_call.1} parent=0 // pred_check_branch
    %11 = sbr.rel (0) target = $region9
  $region8: #{tpu_custom_call.1} parent=0 // pred_region
    _
  $region9: #{tpu_custom_call.1} parent=0 // pred_fallthru
    _
  // Predicated region
  $region10: #{tpu_custom_call.1} parent=0 // pred_check
    _
  $region11: #{tpu_custom_call.1} parent=0 // pred_check_branch
    %13 = sbr.rel (0) target = $region13
  $region12: #{tpu_custom_call.1} parent=0 // pred_region
    _
  $region13: #{tpu_custom_call.1} parent=0 // pred_fallthru
    _
  %v14 = vld [vmem:[%s0] sm:$0xff]
  %v15 = vld [vmem:[%s0 + $0x8] sm:$0xff]
  %v16 = vld [vmem:[%s0 + $0x10] sm:$0xff]
  %v17 = vld [vmem:[%s0 + $0x18] sm:$0xff]
  %vm18 = vcmp.ne.f32.partialorder %v14, %v14
  %vm19 = vcmp.ne.f32.partialorder %v15, %v15
  %vm20 = vcmp.ne.f32.partialorder %v16, %v16
  %vm21 = vcmp.ne.f32.partialorder %v17, %v17
  %v22 = vsel %vm18, 1.0, 0.0
  %v23 = vsel %vm19, 1.0, 0.0
  %v24 = vsel %vm20, 1.0, 0.0
  %v25 = vsel %vm21, 1.0, 0.0
  %vm26 = vcmask 31744
  %v27 = vsel %vm26, %v22, 0.0
  %28 = vadd.xlane.f32.xlu0 %v27
  %v29 = vpop.xlane.xlu0 %28
  %v30 = vsel %vm26, %v23, 0.0
  %31 = vadd.xlane.f32.xlu0 %v30
  %v32 = vpop.xlane.xlu0 %31
  %v33 = vsel %vm26, %v24, 0.0
  %34 = vadd.xlane.f32.xlu0 %v33
  %v35 = vpop.xlane.xlu0 %34
  %v36 = vsel %vm26, %v25, 0.0
  %37 = vadd.xlane.f32.xlu0 %v36
  %v38 = vpop.xlane.xlu0 %37
  %vm39 = vcmp.eq.f32.partialorder %v29, 0.0
  %vm40 = vcmp.eq.f32.partialorder %v32, 0.0
  %vm41 = vcmp.eq.f32.partialorder %v35, 0.0
  %vm42 = vcmp.eq.f32.partialorder %v38, 0.0
  %v43 = vsel %vm39, 1, 0
  %v44 = vsel %vm40, 1, 0
  %v45 = vsel %vm41, 1, 0
  %v46 = vsel %vm42, 1, 0
  %vm47 = vcmp.eq.s32.totalorder %v43, 1
  %vm48 = vcmp.eq.s32.totalorder %v44, 1
  %vm49 = vcmp.eq.s32.totalorder %v45, 1
  %vm50 = vcmp.eq.s32.totalorder %v46, 1
  %v51 = vsel %vm47, %v14, 0.0
  %v52 = vsel %vm48, %v15, 0.0
  %v53 = vsel %vm49, %v16, 0.0
  %v54 = vsel %vm50, %v17, 0.0
  %v55 = vld [vmem:[%s1] sm:$0xf]
  %v56 = vld [vmem:[%s2] sm:$0x1]
  %v58 = vlaneseq
  %v59 = vshrl.u32 %v58, 7
  %v60 = vsub.s32 0, %v59
  %v61 = vrot.slane %v56, %v60
  %v64 = vsel %vm26, %v51, 0
  %v67 = vsel %vm26, %v52, 0
  %v70 = vsel %vm26, %v53, 0
  %v73 = vsel %vm26, %v54, 0
  %vm75 = vcmask 1043456
  %v77 = vsel %vm75, %v55, 0
  %79 = vmatprep.subr.mxu0 0.0
  %80 = vmatpush1.msra.mxu0 %v77
  %81 = vmatprep.subr.mxu0 0.0
  %82 = vmatpush1.msra.mxu0 0.0
  %83 = vmatprep.subr.mxu0 0.0
  %84 = vmatpush1.msra.mxu0 0.0
  %85 = vmatprep.subr.mxu0 0.0
  %86 = vmatpush1.msra.mxu0 0.0
  %87 = vmatprep.subr.mxu0 0.0
  %88 = vmatpush1.msra.mxu0 0.0
  %89 = vmatprep.subr.mxu0 0.0
  %90 = vmatpush1.msra.mxu0 0.0
  %91 = vmatprep.subr.mxu0 0.0
  %92 = vmatpush1.msra.mxu0 0.0
  %93 = vmatprep.subr.mxu0 0.0
  %94 = vmatpush1.msra.mxu0 0.0
  %95 = vmatprep.subr.mxu0 0.0
  %96 = vmatpush1.msra.mxu0 0.0
  %97 = vmatprep.subr.mxu0 0.0
  %98 = vmatpush1.msra.mxu0 0.0
  %99 = vmatprep.subr.mxu0 0.0
  %100 = vmatpush1.msra.mxu0 0.0
  %101 = vmatprep.subr.mxu0 0.0
  %102 = vmatpush1.msra.mxu0 0.0
  %103 = vmatprep.subr.mxu0 0.0
  %104 = vmatpush1.msra.mxu0 0.0
  %105 = vmatprep.subr.mxu0 0.0
  %106 = vmatpush1.msra.mxu0 0.0
  %107 = vmatprep.subr.mxu0 0.0
  %108 = vmatpush1.msra.mxu0 0.0
  %109 = vmatprep.subr.mxu0 0.0
  %110 = vmatpush1.msra.mxu0 0.0
  %111 = vmatprep.subr.mxu0 0.0
  %112 = vmatpush1.msra.mxu0 0.0
  %113 = vmatprep.subr.mxu0 0.0
  %114 = vmatpush1.msra.mxu0 0.0
  %115 = vmatprep.subr.mxu0 0.0
  %116 = vmatpush1.msra.mxu0 0.0
  %117 = vmatprep.subr.mxu0 0.0
  %118 = vmatpush1.msra.mxu0 0.0
  %119 = vmatprep.subr.mxu0 0.0
  %120 = vmatpush1.msra.mxu0 0.0
  %121 = vmatprep.subr.mxu0 0.0
  %122 = vmatpush1.msra.mxu0 0.0
  %123 = vmatprep.subr.mxu0 0.0
  %124 = vmatpush1.msra.mxu0 0.0
  %125 = vmatprep.subr.mxu0 0.0
  %126 = vmatpush1.msra.mxu0 0.0
  %127 = vmatprep.subr.mxu0 0.0
  %128 = vmatpush1.msra.mxu0 0.0
  %129 = vmatprep.subr.mxu0 0.0
  %130 = vmatpush1.msra.mxu0 0.0
  %131 = vmatprep.subr.mxu0 0.0
  %132 = vmatpush1.msra.mxu0 0.0
  %133 = vmatprep.subr.mxu0 0.0
  %134 = vmatpush1.msra.mxu0 0.0
  %135 = vmatprep.subr.mxu0 0.0
  %136 = vmatpush1.msra.mxu0 0.0
  %137 = vmatprep.subr.mxu0 0.0
  %138 = vmatpush1.msra.mxu0 0.0
  %139 = vmatprep.subr.mxu0 0.0
  %140 = vmatpush1.msra.mxu0 0.0
  %141 = vmatprep.subr.mxu0 0.0
  %142 = vmatpush1.msra.mxu0 0.0
  %143 = vmatprep.mubr.f32.mxu0 0.0
  %144 = vmatmul.mubr.f32.gmra.mrb[0].mxu0 %v64
  %v145 = vpop.f32.mrb[0].mxu0
  %v146 = vadd.f32 %v61, %v145
  %v147 = vpop.f32.mrb[0].mxu0
  %148 = vmatprep.mubr.f32.mxu0 0.0
  %149 = vmatmul.mubr.f32.gmra.mrb[0].mxu0 %v67
  %v150 = vpop.f32.mrb[0].mxu0
  %v151 = vadd.f32 %v61, %v150
  %v152 = vpop.f32.mrb[0].mxu0
  %153 = vmatprep.mubr.f32.mxu0 0.0
  %154 = vmatmul.mubr.f32.gmra.mrb[0].mxu0 %v70
  %v155 = vpop.f32.mrb[0].mxu0
  %v156 = vadd.f32 %v61, %v155
  %v157 = vpop.f32.mrb[0].mxu0
  %158 = vmatprep.mubr.f32.mxu0 0.0
  %159 = vmatmul.mubr.f32.gmra.mrb[0].mxu0 %v73
  %v160 = vpop.f32.mrb[0].mxu0
  %v161 = vadd.f32 %v61, %v160
  %v162 = vpop.f32.mrb[0].mxu0
  %163 = vdwg.mxu0
  %v164 = vsel %vm47, %v146, 0.0
  %v165 = vsel %vm48, %v151, 0.0
  %v166 = vsel %vm49, %v156, 0.0
  %v167 = vsel %vm50, %v161, 0.0
  %vm168 = vcmask 64512
  %169 = vst.msk [vmem:[%s3] sm:$0xff] %vm168, %v164
  %170 = vst.msk [vmem:[%s3 + $0x8] sm:$0xff] %vm168, %v165
  %171 = vst.msk [vmem:[%s3 + $0x10] sm:$0xff] %vm168, %v166
  %172 = vst.msk [vmem:[%s3 + $0x18] sm:$0xff] %vm168, %v167
  // Predicated region
  $region14: #{tpu_custom_call.1} parent=0 // pred_check
    _
  $region15: #{tpu_custom_call.1} parent=0 // pred_check_branch
    %174 = sbr.rel (0) target = $region17
  $region16: #{tpu_custom_call.1} parent=0 // pred_region
    _
  $region17: #{tpu_custom_call.1} parent=0 // pred_fallthru
    _
  // Predicated region
  $region18: #{tpu_custom_call.1} parent=0 // pred_check
    _
  $region19: #{tpu_custom_call.1} parent=0 // pred_check_branch
    %176 = sbr.rel (0) target = $region21
  $region20: #{tpu_custom_call.1} parent=0 // pred_region
    _
  $region21: #{tpu_custom_call.1} parent=0 // pred_fallthru
    _

</llo_original>
